<compile_context>
chip_gen: v5e
topology: v5e:2x2
jax: 0.10.0
libtpu: 0.0.40
codegen_flags: <defaults>
</compile_context>

<pallas_src>
import jax
import jax.numpy as jnp
from jax.experimental import pallas as pl
from jax.experimental.pallas import tpu as pltpu


def _ce_kernel(logits_ref, target_ref, loss_ref):
    """Per-pixel cross entropy.

    logits_ref: (C, T) HBM dtype (bf16/f32), target_ref: (1, T) int32,
    loss_ref:   (1, T) float32.

    NOTE: edge tiles (pl.cdiv grid) read garbage lanes past H*W.  Every
    reduction here is per lane column, so garbage never contaminates valid
    columns; exp() of garbage may produce inf/NaN only in lanes whose outputs
    are discarded by the masked final-block store.  Do NOT add any
    cross-column reduction to this kernel.
    """
    logits = logits_ref[...]                                  # (C, T) native dtype
    tgt = target_ref[...]                                     # (1, T) int32
    num_classes = logits.shape[0]

    # Class max and target-logit gather in the *native* dtype.  Both are
    # exact: max is exact in any float dtype, and the select keeps exactly one
    # nonzero per lane column so the sum is exact too.  On v7x bf16 inputs
    # this runs at packed-bf16 VPU throughput; on f32 inputs it is unchanged.
    m = jnp.max(logits, axis=0, keepdims=True)                # (1, T)

    # (C, 1) sublane iota broadcast against the (1, T) targets in the compare;
    # avoids a full (C, T) int32 iota temporary in VMEM.
    class_iota = jax.lax.broadcasted_iota(jnp.int32, (num_classes, 1), 0)
    tgt_logit = jnp.sum(jnp.where(class_iota == tgt, logits, 0.0),
                        axis=0, keepdims=True)                # (1, T) native dtype

    # Numerically-stable logsumexp over the class (sublane) axis in f32.
    m_f32 = m.astype(jnp.float32)
    shifted = logits.astype(jnp.float32) - m_f32              # (C, T) f32
    lse = m_f32 + jnp.log(jnp.sum(jnp.exp(shifted), axis=0, keepdims=True))

    # PyTorch semantics: ignore_index (-100) contributes loss 0.  NOTE: any
    # other out-of-range class index is also treated as ignored here, whereas
    # PyTorch would error / be UB on it.
    valid = jnp.logical_and(tgt >= 0, tgt < num_classes)
    loss = lse - tgt_logit.astype(jnp.float32)
    loss_ref[...] = jnp.where(valid, loss, 0.0).astype(loss_ref.dtype)
    # TODO(synk): if still VALU-bound on v7x with large C, offload the two
    # class reductions to the idle MXU via a ones(1, C) @ (C, T) matmul.


def _vmem_capacity_bytes():
    """Physical VMEM per TensorCore (v5e/v6e: 128 MiB, v7x: 64 MiB)."""
    try:
        return int(pltpu.get_tpu_info().vmem_capacity_bytes)
    except Exception:
        return 64 * 1024 * 1024   # assume the smallest (v7x) part


def _pick_tile_hw(hw, num_classes, itemsize, n_batch, vmem_budget_bytes):
    """Largest lane-dense (multiple-of-128) pixel tile whose *full* estimated
    VMEM footprint fits the budget, then capped so the grid keeps >= 4 steps
    (>= 2 pipelined steps per v7x TensorCore so DMA overlaps compute)."""
    # Per-pixel bytes: double-buffered logits block (HBM dtype), double-buffered
    # int32 targets + f32 losses, and ~5 full-tile f32/int32 in-kernel
    # temporaries (f32 upcast, exp, compare/select, slack).
    per_pixel = 2 * num_classes * itemsize + 2 * 4 + 2 * 4 + 5 * num_classes * 4
    hw_pad = pl.cdiv(hw, 128) * 128
    tile = max(128, (vmem_budget_bytes // per_pixel) // 128 * 128)
    tile = min(tile, hw_pad)
    while tile > 128 and n_batch * pl.cdiv(hw, tile) < 4:
        tile -= 128
    return tile


def cross_entropy_loss(input_nchw, target_nhw):
    """Equivalent of F.cross_entropy(input, target, weight=None, reduction='none').

    input_nchw: (N, C, H, W) float logits (any float dtype; upcast per tile in-kernel)
    target_nhw: (N, H, W) int class indices (ignore_index=-100 -> loss 0)
    returns:    (N, H, W) float32 per-pixel losses
    """
    # TODO(synk): per-class `weight` is unused (the module constructs weight=None).
    # TODO(synk): vocab-scale C (>=16k) would want a class-chunked online
    #             logsumexp (second "arbitrary" grid axis + running scratch).
    # TODO(synk): for small/odd C with W a multiple of 128 and H >= 8, a 3-D
    #             (C, TILE_H, W_TILE) block (C off the sublane axis) avoids
    #             sublane padding and roughly doubles VPU throughput at C=4.
    N, C, H, W = input_nchw.shape
    HW = H * W

    logits = input_nchw.reshape(N, C, HW)          # free view: no transpose, no dtype cast
    targets = target_nhw.reshape(N, 1, HW)
    if targets.dtype != jnp.int32:
        # TODO(synk): prefer int32 targets upstream; this cast is an extra HBM pass.
        targets = targets.astype(jnp.int32)

    vmem_cap = _vmem_capacity_bytes()
    # Scoped VMEM limit: 48 MiB on v7x (64 MiB physical), 96 MiB on v5e/v6e (128 MiB).
    vmem_limit = min((vmem_cap * 3) // 4, 96 * 1024 * 1024)
    # Keep the estimated live footprint at ~half the scoped limit: ~2 MiB bf16
    # logits blocks on v7x, ~4 MiB on v5e/v6e -- both comfortably past the
    # ~512-lane knee of the HBM roofline.
    itemsize = jnp.dtype(input_nchw.dtype).itemsize
    tile_hw = _pick_tile_hw(HW, C, itemsize, N, vmem_limit // 2)
    grid = (N, pl.cdiv(HW, tile_hw))

    losses = pl.pallas_call(
        _ce_kernel,
        out_shape=jax.ShapeDtypeStruct((N, 1, HW), jnp.float32),
        grid_spec=pltpu.PrefetchScalarGridSpec(
            num_scalar_prefetch=0,
            grid=grid,
            in_specs=[
                pl.BlockSpec((None, C, tile_hw), lambda n, j: (n, 0, j)),
                pl.BlockSpec((None, 1, tile_hw), lambda n, j: (n, 0, j)),
            ],
            out_specs=pl.BlockSpec((None, 1, tile_hw), lambda n, j: (n, 0, j)),
        ),
        compiler_params=pltpu.CompilerParams(
            dimension_semantics=("parallel", "parallel"),
            vmem_limit_bytes=int(vmem_limit),
        ),
    )(logits, targets)

    return losses.reshape(N, H, W)


if __name__ == "__main__":
    key = jax.random.PRNGKey(0)
    k1, k2 = jax.random.split(key)

    N, C, H, W = 2, 4, 16, 16
    x = jax.random.normal(k1, (N, C, H, W), dtype=jnp.float32)
    target = jax.random.randint(k2, (N, H, W), 0, C, dtype=jnp.int32)
    # A few ignored pixels (PyTorch default ignore_index=-100 -> loss 0).
    target = target.at[0, 0, :3].set(-100)

    loss = cross_entropy_loss(x, target)
    loss = jax.block_until_ready(loss)

    # Pure-JAX reference of F.cross_entropy(reduction='none').
    logp = jax.nn.log_softmax(x.astype(jnp.float32), axis=1)        # (N, C, H, W)
    safe_tgt = jnp.clip(target, 0, C - 1)
    nll = -jnp.take_along_axis(logp, safe_tgt[:, None, :, :], axis=1)[:, 0]
    valid = jnp.logical_and(target >= 0, target < C)
    ref = jnp.where(valid, nll, 0.0)

    assert loss.shape == (N, H, W)
    assert jnp.allclose(loss, ref, atol=1e-5, rtol=1e-5)

    print("KERNEL_OK")
</pallas_src>

<mosaic_0001>
module attributes {stable_mosaic.version = 11 : i64} {
  func.func @_ce_kernel(%arg0: i32, %arg1: i32, %arg2: memref<1x4x128xf32, #tpu.memory_space<vmem>>, %arg3: memref<1x1x128xi32, #tpu.memory_space<vmem>>, %arg4: memref<1x1x128xf32, #tpu.memory_space<vmem>>) attributes {dimension_semantics = [#tpu.dimension_semantics<parallel>, #tpu.dimension_semantics<parallel>], iteration_bounds = array<i64: 2, 2>, scalar_prefetch = 0 : i64, scratch_operands = 0 : i64, tpu.core_type = #tpu.core_type<tc>, window_params = [{transform_indices = @transform_0, window_bounds = array<i64: 1, 4, 128>}, {transform_indices = @transform_1, window_bounds = array<i64: 1, 1, 128>}, {transform_indices = @transform_2, window_bounds = array<i64: 1, 1, 128>}]} {
    %c0 = arith.constant 0 : index
    %c0_0 = arith.constant 0 : index
    %c0_1 = arith.constant 0 : index
    %0 = vector.load %arg2[%c0, %c0_0, %c0_1] : memref<1x4x128xf32, #tpu.memory_space<vmem>>, vector<1x4x128xf32>
    %1 = vector.shape_cast %0 : vector<1x4x128xf32> to vector<4x128xf32>
    %c0_2 = arith.constant 0 : index
    %c0_3 = arith.constant 0 : index
    %c0_4 = arith.constant 0 : index
    %2 = vector.load %arg3[%c0_2, %c0_3, %c0_4] : memref<1x1x128xi32, #tpu.memory_space<vmem>>, vector<1x1x128xi32>
    %3 = vector.shape_cast %2 : vector<1x1x128xi32> to vector<1x128xi32>
    %cst = arith.constant dense<0xFF800000> : vector<128xf32>
    %4 = vector.multi_reduction <maximumf>, %1, %cst [0] : vector<4x128xf32> to vector<128xf32>
    %5 = vector.shape_cast %4 : vector<128xf32> to vector<1x128xf32>
    %6 = tpu.iota {dimensions = array<i32: 0>} : vector<4x1xi32>
    %7 = vector.broadcast %6 : vector<4x1xi32> to vector<4x128xi32>
    %8 = vector.broadcast %3 : vector<1x128xi32> to vector<4x128xi32>
    %9 = arith.cmpi eq, %7, %8 : vector<4x128xi32>
    %cst_5 = arith.constant 0.000000e+00 : f32
    %10 = vector.broadcast %cst_5 : f32 to vector<4x128xf32>
    %11 = arith.select %9, %1, %10 : vector<4x128xi1>, vector<4x128xf32>
    %cst_6 = arith.constant dense<0.000000e+00> : vector<128xf32>
    %12 = vector.multi_reduction <add>, %11, %cst_6 [0] : vector<4x128xf32> to vector<128xf32>
    %13 = vector.shape_cast %12 : vector<128xf32> to vector<1x128xf32>
    %14 = vector.broadcast %5 : vector<1x128xf32> to vector<4x128xf32>
    %15 = arith.subf %1, %14 : vector<4x128xf32>
    %16 = math.exp %15 : vector<4x128xf32>
    %cst_7 = arith.constant dense<0.000000e+00> : vector<128xf32>
    %17 = vector.multi_reduction <add>, %16, %cst_7 [0] : vector<4x128xf32> to vector<128xf32>
    %18 = vector.shape_cast %17 : vector<128xf32> to vector<1x128xf32>
    %19 = math.log %18 : vector<1x128xf32>
    %20 = arith.addf %5, %19 : vector<1x128xf32>
    %c0_i32 = arith.constant 0 : i32
    %21 = vector.broadcast %c0_i32 : i32 to vector<1x128xi32>
    %22 = arith.cmpi sge, %3, %21 : vector<1x128xi32>
    %c4_i32 = arith.constant 4 : i32
    %23 = vector.broadcast %c4_i32 : i32 to vector<1x128xi32>
    %24 = arith.cmpi slt, %3, %23 : vector<1x128xi32>
    %25 = arith.andi %22, %24 : vector<1x128xi1>
    %26 = arith.subf %20, %13 : vector<1x128xf32>
    %cst_8 = arith.constant 0.000000e+00 : f32
    %27 = vector.broadcast %cst_8 : f32 to vector<1x128xf32>
    %28 = arith.select %25, %26, %27 : vector<1x128xi1>, vector<1x128xf32>
    %c0_9 = arith.constant 0 : index
    %c0_10 = arith.constant 0 : index
    %c0_11 = arith.constant 0 : index
    %29 = vector.load %arg4[%c0_9, %c0_10, %c0_11] : memref<1x1x128xf32, #tpu.memory_space<vmem>>, vector<1x1x128xf32>
    %30 = vector.shape_cast %29 : vector<1x1x128xf32> to vector<1x128xf32>
    %31 = vector.shape_cast %28 : vector<1x128xf32> to vector<1x1x128xf32>
    tpu.vector_store %arg4[%c0_9, %c0_10, %c0_11], %31 {strides = array<i32>} : memref<1x1x128xf32, #tpu.memory_space<vmem>>, vector<1x1x128xf32>,
    return
  }
  func.func @transform_0(%arg0: i32, %arg1: i32) -> (i32, i32, i32) {
    %c0_i32 = arith.constant 0 : i32
    %c0_i32_0 = arith.constant 0 : i32
    return %arg0, %c0_i32, %arg1 : i32, i32, i32
  }
  func.func @transform_1(%arg0: i32, %arg1: i32) -> (i32, i32, i32) {
    %c0_i32 = arith.constant 0 : i32
    %c0_i32_0 = arith.constant 0 : i32
    return %arg0, %c0_i32, %arg1 : i32, i32, i32
  }
  func.func @transform_2(%arg0: i32, %arg1: i32) -> (i32, i32, i32) {
    %c0_i32 = arith.constant 0 : i32
    %c0_i32_0 = arith.constant 0 : i32
    return %arg0, %c0_i32, %arg1 : i32, i32, i32
  }
}

</mosaic_0001>

<llo_original>
// kernel: tpu_custom_call.1
$region0: #{tpu_custom_call.1}
  #allocation0 [shape = 'u32[]', space=smem, size = 0x4, offset = 0x4, fixed_abs, tag = 'smem constant byte address 0x4 - core index']
  #allocation1 [shape = 'u32[72,128]{1,0:T(1,128)}', space=vmem, size = 0x9000, scoped, tag = 'internal scratch']
  %s0 = inlined_call_operand.hbm [shape: f32[2,4,256], index: 0, kind: input, shape index: {}]
  %s1 = inlined_call_operand.hbm [shape: s32[2,1,256], index: 1, kind: input, shape index: {}]
  %s2 = inlined_call_operand.hbm [shape: f32[2,1,256], index: 2, kind: output, shape index: {}]
  %s3 = sld [smem:[#allocation0]]
  $region49: #{tpu_custom_call.1} parent=0
    _
  %s5 = ssub.s32 1, %s3
  %s6 = scalar_select 0, %s5, %s3
  $region1: #{tpu_custom_call.1} parent=0
    #allocation2 [shape = 'u8[4096]{0}', space=vmem, size = 0x1000, scoped, tag = 'input window, operand 0']
    #allocation3 [shape = 's32[2]{0}', space=sflag, size = 0x8, scoped, tag = 'scoped memory for tpu_custom_call.1']
    #allocation4 [shape = 's32[2]{0}', space=sflag, size = 0x8, scoped, tag = 'scoped memory for tpu_custom_call.1']
    #allocation5 [shape = 'u8[1024]{0}', space=vmem, size = 0x400, scoped, tag = 'input window, operand 1']
    #allocation6 [shape = 's32[2]{0}', space=sflag, size = 0x8, scoped, tag = 'scoped memory for tpu_custom_call.1']
    #allocation7 [shape = 'u8[1024]{0}', space=vmem, size = 0x400, scoped, tag = 'output window, operand 0']
    %7 = vsyncpa [#allocation3], 0
    %s8 = scalar_lea.sflag [#allocation3], 1
    %9 = vsyncpa %s8, 0
    %10 = vsyncpa [#allocation6], 0
    %s11 = scalar_lea.sflag [#allocation6], 1
    %12 = vsyncpa %s11, 0
    %13 = vsyncpa [#allocation4], 0
    %s14 = scalar_lea.sflag [#allocation4], 1
    %15 = vsyncpa %s14, 0
    loop: start=0, step=1, limit=6
    $region2: #{tpu_custom_call.1} parent=1 // loop_pre_header
      _
    $region3: #{tpu_custom_call.1} parent=1 // loop_header
      %s17 = sphi 0, %s21
      %p18 = scmp.ge.s32.totalorder %s17, 6
      %s24 = sphi 0, %s36
      %s25 = sphi 0, %s32
      %s26 = sphi 0, %s24
      %s27 = sphi 0, %s25
      %s28 = sphi 0, %s26
      %s29 = sphi 0, %s27
      %s41 = sphi 0, %s43
      %s44 = sphi 0, %s41
      %s45 = sphi 0, %s44
      %s61 = sphi 0, %s45
      %s69 = sphi 0, %s71
      %s72 = sphi 0, %s69
      %s73 = sphi 0, %s72
      %s89 = sphi 0, %s73
      %s97 = sphi 0, %s99
      %s100 = sphi 0, %s97
      %s101 = sphi 0, %s100
      %s117 = sphi 0, %s101
    $region4: #{tpu_custom_call.1} parent=1 // loop_header_branch
      %20 = sbr.rel (%p18) target = $region8
    $region5: #{tpu_custom_call.1} parent=1 // loop_body
      %s22 = ssub.s32 %s17, 1
      %s23 = ssub.s32 %s17, 2
      %s30 = sadd.s32 1, %s25
      %p31 = scmp.ge.s32.totalorder %s30, 2
      %s32 = scalar_select %p31, 0, %s30
      %s33 = sadd.s32 1, %s24
      %s34 = scalar_select %p31, %s33, %s24
      %p35 = scmp.ge.s32.totalorder %s34, 2
      %s36 = scalar_select %p35, 0, %s34
      %s37 = ssub.s32 %s24, %s36
      %s38 = ssub.s32 %s25, %s32
      %s39 = sor.u32 %s37, %s38
      %p40 = scmp.eq.s32.totalorder %s39, 0
      %s42 = sadd.s32 %s41, 1
      %s43 = scalar_select %p40, %s41, %s42
      %p46 = pneg %p40
      %p47 = scmp.eq.s32.totalorder %s17, 3
      %p48 = por %p46, %p47
      %p49 = scmp.ne.s32.totalorder %s41, %s44
      %p50 = scmp.eq.s32.totalorder %s17, 0
      %p51 = por %p49, %p50
      %p52 = scmp.ne.s32.totalorder %s41, %s44
      %p53 = scmp.eq.s32.totalorder %s22, 3
      %p54 = por %p52, %p53
      %p55 = scmp.ne.s32.totalorder %s44, %s45
      %p56 = scmp.eq.s32.totalorder %s22, 0
      %p57 = por %p55, %p56
      %p58 = scmp.ne.s32.totalorder %s44, %s45
      %p59 = scmp.eq.s32.totalorder %s23, 3
      %p60 = por %p58, %p59
      %p62 = scmp.ne.s32.totalorder %s45, %s61
      %p63 = scmp.eq.s32.totalorder %s23, 0
      %p64 = por %p62, %p63
      %s65 = ssub.s32 %s24, %s36
      %s66 = ssub.s32 %s25, %s32
      %s67 = sor.u32 %s65, %s66
      %p68 = scmp.eq.s32.totalorder %s67, 0
      %s70 = sadd.s32 %s69, 1
      %s71 = scalar_select %p68, %s69, %s70
      %p74 = pneg %p68
      %p75 = scmp.eq.s32.totalorder %s17, 3
      %p76 = por %p74, %p75
      %p77 = scmp.ne.s32.totalorder %s69, %s72
      %p78 = scmp.eq.s32.totalorder %s17, 0
      %p79 = por %p77, %p78
      %p80 = scmp.ne.s32.totalorder %s69, %s72
      %p81 = scmp.eq.s32.totalorder %s22, 3
      %p82 = por %p80, %p81
      %p83 = scmp.ne.s32.totalorder %s72, %s73
      %p84 = scmp.eq.s32.totalorder %s22, 0
      %p85 = por %p83, %p84
      %p86 = scmp.ne.s32.totalorder %s72, %s73
      %p87 = scmp.eq.s32.totalorder %s23, 3
      %p88 = por %p86, %p87
      %p90 = scmp.ne.s32.totalorder %s73, %s89
      %p91 = scmp.eq.s32.totalorder %s23, 0
      %p92 = por %p90, %p91
      %s93 = ssub.s32 %s24, %s36
      %s94 = ssub.s32 %s25, %s32
      %s95 = sor.u32 %s93, %s94
      %p96 = scmp.eq.s32.totalorder %s95, 0
      %s98 = sadd.s32 %s97, 1
      %s99 = scalar_select %p96, %s97, %s98
      %p102 = pneg %p96
      %p103 = scmp.eq.s32.totalorder %s17, 3
      %p104 = por %p102, %p103
      %p105 = scmp.ne.s32.totalorder %s97, %s100
      %p106 = scmp.eq.s32.totalorder %s17, 0
      %p107 = por %p105, %p106
      %p108 = scmp.ne.s32.totalorder %s97, %s100
      %p109 = scmp.eq.s32.totalorder %s22, 3
      %p110 = por %p108, %p109
      %p111 = scmp.ne.s32.totalorder %s100, %s101
      %p112 = scmp.eq.s32.totalorder %s22, 0
      %p113 = por %p111, %p112
      %p114 = scmp.ne.s32.totalorder %s100, %s101
      %p115 = scmp.eq.s32.totalorder %s23, 3
      %p116 = por %p114, %p115
      %p118 = scmp.ne.s32.totalorder %s101, %s117
      %p119 = scmp.eq.s32.totalorder %s23, 0
      %p120 = por %p118, %p119
      %p121 = scmp.le.s32.totalorder 1, %s17
      %p122 = scmp.lt.s32.totalorder %s17, 5
      %p123 = pnand %p121, %p122
      %p124 = pneg %p123
      // Predicated region
      $region9: #{tpu_custom_call.1} parent=5 // pred_check
        _
      $region10: #{tpu_custom_call.1} parent=5 // pred_check_branch
        %126 = sbr.rel (%p123) target = $region12
      $region11: #{tpu_custom_call.1} parent=5 // pred_region
        %s127 = ssub.s32 %s17, 1
      $region12: #{tpu_custom_call.1} parent=5 // pred_fallthru
        _
      %p128 = scmp.lt.s32.totalorder %s17, 4
      // Predicated region
      $region13: #{tpu_custom_call.1} parent=5 // pred_check
        %p129 = pneg %p128
      $region14: #{tpu_custom_call.1} parent=5 // pred_check_branch
        %131 = sbr.rel (%p129) target = $region16
      $region15: #{tpu_custom_call.1} parent=5 // pred_region
        // Predicated region
        $region17: #{tpu_custom_call.1} parent=15 // pred_check
          %p132 = pneg %p51
        $region18: #{tpu_custom_call.1} parent=15 // pred_check_branch
          %134 = sbr.rel (%p132) target = $region20
        $region19: #{tpu_custom_call.1} parent=15 // pred_region
          %s135 = sand.u32 %s41, 1
          %s136 = scalar_lea.sflag [#allocation3], %s135
          %s137 = sand.u32 %s41, 1
          %s138 = smul.addr %s137, 4
          %s139 = scalar_lea.vmem [#allocation2], %s138
          %141 = vsyncadd %s136, 0
          %s142 = smul.addr %s24, 2
          %s143 = sadd.s32 %s25, %s142
          %s144 = smul.addr %s143, 4
          %s145 = scalar_lea.hbm %s0, %s144
          %s147 = sshll.u32 %s145, 4
          %s148 = int_to_ptr.hbm [resolvable:$true] %s147
          %s149 = sshll.u32 %s139, 4
          %s150 = int_to_ptr.vmem [resolvable:$true] %s149
          %152 = dma.hbm_to_vmem [thread:$0]  %s148, 64, %s150, %s136
        $region20: #{tpu_custom_call.1} parent=15 // pred_fallthru
          _
        // Predicated region
        $region21: #{tpu_custom_call.1} parent=15 // pred_check
          %p153 = pneg %p79
        $region22: #{tpu_custom_call.1} parent=15 // pred_check_branch
          %155 = sbr.rel (%p153) target = $region24
        $region23: #{tpu_custom_call.1} parent=15 // pred_region
          %s156 = sand.u32 %s69, 1
          %s157 = scalar_lea.sflag [#allocation6], %s156
          %s158 = sand.u32 %s69, 1
          %s159 = scalar_lea.vmem [#allocation5], %s158
          %161 = vsyncadd %s157, 0
          %s162 = smul.addr %s24, 2
          %s163 = sadd.s32 %s25, %s162
          %s164 = scalar_lea.hbm %s1, %s163
          %s166 = sshll.u32 %s164, 4
          %s167 = int_to_ptr.hbm [resolvable:$true] %s166
          %s168 = sshll.u32 %s159, 4
          %s169 = int_to_ptr.vmem [resolvable:$true] %s168
          %171 = dma.hbm_to_vmem [thread:$0]  %s167, 16, %s169, %s157
        $region24: #{tpu_custom_call.1} parent=15 // pred_fallthru
          _
      $region16: #{tpu_custom_call.1} parent=5 // pred_fallthru
        _
      %p172 = scmp.le.s32.totalorder 1, %s17
      %p173 = scmp.lt.s32.totalorder %s17, 5
      %p174 = pnand %p172, %p173
      %p175 = pneg %p174
      // Predicated region
      $region25: #{tpu_custom_call.1} parent=5 // pred_check
        _
      $region26: #{tpu_custom_call.1} parent=5 // pred_check_branch
        %177 = sbr.rel (%p174) target = $region28
      $region27: #{tpu_custom_call.1} parent=5 // pred_region
        %s178 = ssub.s32 %s17, 1
        %s179 = sand.u32 %s44, 1
        %s180 = scalar_lea.sflag [#allocation3], %s179
        %s181 = sand.u32 %s44, 1
        %s182 = smul.addr %s181, 4
        %s183 = scalar_lea.vmem [#allocation2], %s182
        // Predicated region
        $region29: #{tpu_custom_call.1} parent=27 // pred_check
          %p184 = pneg %p57
        $region30: #{tpu_custom_call.1} parent=27 // pred_check_branch
          %186 = sbr.rel (%p184) target = $region32
        $region31: #{tpu_custom_call.1} parent=27 // pred_region
          %188 = dma.done %s180, 64
        $region32: #{tpu_custom_call.1} parent=27 // pred_fallthru
          _
        %s189 = sand.u32 %s72, 1
        %s190 = scalar_lea.sflag [#allocation6], %s189
        %s191 = sand.u32 %s72, 1
        %s192 = scalar_lea.vmem [#allocation5], %s191
        // Predicated region
        $region33: #{tpu_custom_call.1} parent=27 // pred_check
          %p193 = pneg %p85
        $region34: #{tpu_custom_call.1} parent=27 // pred_check_branch
          %195 = sbr.rel (%p193) target = $region36
        $region35: #{tpu_custom_call.1} parent=27 // pred_region
          %197 = dma.done %s190, 16
        $region36: #{tpu_custom_call.1} parent=27 // pred_fallthru
          _
        %s198 = sand.u32 %s44, 1
        %s199 = scalar_lea.sflag [#allocation3], %s198
        %s200 = sand.u32 %s44, 1
        %s201 = smul.addr %s200, 4
        %s202 = scalar_lea.vmem [#allocation2], %s201
        %p203 = pneg %p57
        %p204 = pneg %p54
        %s205 = sand.u32 %s72, 1
        %s206 = scalar_lea.sflag [#allocation6], %s205
        %s207 = sand.u32 %s72, 1
        %s208 = scalar_lea.vmem [#allocation5], %s207
        %p209 = pneg %p85
        %p210 = pneg %p82
        %p211 = pneg %p113
        %p212 = pneg %p110
        %s213 = sand.u32 %s100, 1
        %s214 = scalar_lea.sflag [#allocation4], %s213
        %s215 = sand.u32 %s100, 1
        %s216 = scalar_lea.vmem [#allocation7], %s215
        %v217 = vld [vmem:[%s183] sm:$0xf]
        %v218 = vld [vmem:[%s192] sm:$0x1]
        %vm219 = vcmask 1043456
        %v220 = vsel %vm219, %v217, -inf
        %v221 = vrot.slane %v220, 4
        %v222 = vmax.f32 %v220, %v221
        %v223 = vrot.slane %v222, 2
        %v224 = vmax.f32 %v222, %v223
        %v225 = vrot.slane %v224, 1
        %v226 = vmax.f32 %v224, %v225
        %v227 = vlaneseq
        %v228 = vshrl.u32 %v227, 7
        %v229 = vperm.slane %v218, 0
        %vm230 = vcmp.eq.s32.totalorder %v228, %v229
        %v231 = vsel %vm230, %v217, 0.0
        %v232 = vsel %vm219, %v231, 0.0
        %v233 = vrot.slane %v232, 4
        %v234 = vadd.f32 %v232, %v233
        %v235 = vrot.slane %v234, 2
        %v236 = vadd.f32 %v234, %v235
        %v237 = vrot.slane %v236, 1
        %v238 = vadd.f32 %v236, %v237
        %v239 = vsub.f32 %v217, %v226
        %v240 = vmul.f32 %v239, 1.442695
        %v241 = vpow.pop %v240
        %v242 = vsel %vm219, %v241, 0.0
        %v243 = vrot.slane %v242, 4
        %v244 = vadd.f32 %v242, %v243
        %v245 = vrot.slane %v244, 2
        %v246 = vadd.f32 %v244, %v245
        %v247 = vrot.slane %v246, 1
        %v248 = vadd.f32 %v246, %v247
        %v249 = vlog2.pop %v248
        %v250 = vmul.f32 %v249, 0.6931472
        %v251 = vadd.f32 %v226, %v250
        %vm252 = vcmp.ge.s32.totalorder %v218, 0
        %vm253 = vcmp.lt.s32.totalorder %v218, 4
        %vm254 = vmand %vm252, %vm253
        %v255 = vsub.f32 %v251, %v238
        %v256 = vsel %vm254, %v255, 0.0
        %257 = vst [vmem:[%s216] sm:$0x1] %v256
        %s258 = sand.u32 %s100, 1
        %s259 = scalar_lea.sflag [#allocation4], %s258
        %s260 = sand.u32 %s100, 1
        %s261 = scalar_lea.vmem [#allocation7], %s260
        // Predicated region
        $region37: #{tpu_custom_call.1} parent=27 // pred_check
          %p262 = pneg %p110
        $region38: #{tpu_custom_call.1} parent=27 // pred_check_branch
          %264 = sbr.rel (%p262) target = $region40
        $region39: #{tpu_custom_call.1} parent=27 // pred_region
          %266 = vsyncadd %s259, 0
          %s267 = smul.addr %s26, 2
          %s268 = sadd.s32 %s27, %s267
          %s269 = scalar_lea.hbm %s2, %s268
          %s271 = sshll.u32 %s261, 4
          %s272 = int_to_ptr.vmem [resolvable:$true] %s271
          %s273 = sshll.u32 %s269, 4
          %s274 = int_to_ptr.hbm [resolvable:$true] %s273
          %276 = dma.vmem_to_hbm [thread:$0]  %s272, 16, %s274, %s259
        $region40: #{tpu_custom_call.1} parent=27 // pred_fallthru
          _
      $region28: #{tpu_custom_call.1} parent=5 // pred_fallthru
        _
      %p277 = scmp.le.s32.totalorder 2, %s17
      // Predicated region
      $region41: #{tpu_custom_call.1} parent=5 // pred_check
        %p278 = pneg %p277
      $region42: #{tpu_custom_call.1} parent=5 // pred_check_branch
        %280 = sbr.rel (%p278) target = $region44
      $region43: #{tpu_custom_call.1} parent=5 // pred_region
        %s281 = ssub.s32 %s17, 2
        // Predicated region
        $region45: #{tpu_custom_call.1} parent=43 // pred_check
          %p282 = pneg %p116
        $region46: #{tpu_custom_call.1} parent=43 // pred_check_branch
          %284 = sbr.rel (%p282) target = $region48
        $region47: #{tpu_custom_call.1} parent=43 // pred_region
          %s285 = sand.u32 %s101, 1
          %s286 = scalar_lea.sflag [#allocation4], %s285
          %s287 = sand.u32 %s101, 1
          %s288 = scalar_lea.vmem [#allocation7], %s287
          %290 = dma.done %s286, 16
        $region48: #{tpu_custom_call.1} parent=43 // pred_fallthru
          _
      $region44: #{tpu_custom_call.1} parent=5 // pred_fallthru
        _
    $region6: #{tpu_custom_call.1} parent=1 // loop_footer
      %s21 = sadd.s32 1, %s17
    $region7: #{tpu_custom_call.1} parent=1 // loop_footer_branch
      %16 = sbr.rel target = $region3
    $region8: #{tpu_custom_call.1} parent=1 // loop_exit
      _
    %291 = vsyncpa [#allocation3], 1
    %s292 = scalar_lea.sflag [#allocation3], 1
    %293 = vsyncpa %s292, 1
    %294 = vsyncpa [#allocation6], 1
    %s295 = scalar_lea.sflag [#allocation6], 1
    %296 = vsyncpa %s295, 1
    %297 = vsyncpa [#allocation4], 1
    %s298 = scalar_lea.sflag [#allocation4], 1
    %299 = vsyncpa %s298, 1

</llo_original>
